<compile_context>
chip_gen: v7x
topology: tpu7x:2x2x1
jax: 0.10.0
libtpu: 0.0.40
codegen_flags: <defaults>
</compile_context>

<pallas_src>
import math

import jax
import jax.numpy as jnp
from jax.experimental import pallas as pl
from jax.experimental.pallas import tpu as pltpu


def _sin_time_emb_kernel(t_ref, freq2_ref, phase2_ref, o_ref):
    # t_ref: [TB, 1] f32; freq2_ref / phase2_ref: [1, 2H] f32 (resident across grid);
    # o_ref: [TB, 2H] out_dtype.
    # Outer product via VPU broadcast, then a single EUP sine pass; phase 0 gives
    # the sin half, phase pi/2 gives the cos half.
    arg = t_ref[...] * freq2_ref[...] + phase2_ref[...]      # [TB, 2H]
    o_ref[...] = jnp.sin(arg).astype(o_ref.dtype)             # one lane-dense store


def sinusoidal_time_embedding(t, inv_freq, *, out_dtype=jnp.float32, block_b=512):
    """t: [B] or [B, 1] float; inv_freq: [H] float -> [B, 2H] out_dtype."""
    if t.ndim == 1:
        t = t[:, None]
    t = t.astype(jnp.float32)
    B = int(t.shape[0])
    H = int(inv_freq.shape[0])
    D = 2 * H

    inv_freq = inv_freq.astype(jnp.float32)
    # Phase-shifted single-sine inputs (tiny, stay resident across the B grid).
    freq2 = jnp.tile(inv_freq, 2)[None, :]                                   # [1, 2H]
    phase2 = jnp.concatenate(
        [jnp.zeros((H,), jnp.float32),
         jnp.full((H,), 0.5 * math.pi, jnp.float32)])[None, :]               # [1, 2H]

    out_itemsize = jnp.dtype(out_dtype).itemsize
    # Sublane packing of the output tile: 8 rows for 32-bit, 16 for 16-bit dtypes.
    row_align = max(8, 32 // out_itemsize)

    # Cap TB so the f32 compute tile (TB*D*4B) stays <= ~4 MiB; with intermediates
    # and the double-buffered output this keeps total VMEM use to a few MiB,
    # comfortably inside v7x's 64 MiB physical VMEM even for wide embeddings.
    tb_cap = (4 * 1024 * 1024) // max(D * 4, 1)
    tb_cap = max(row_align, (tb_cap // row_align) * row_align)
    tb_max = max(row_align, (min(int(block_b), tb_cap) // row_align) * row_align)

    if B <= 32:
        # Tiny batch: one block covering the whole batch (block == full dim is legal);
        # splitting would only add ~0.35 us grid-step overhead.
        TB = B
    elif B <= tb_max:
        # Mid-size batch: >= 2 grid steps so the "parallel" axis can shard across
        # both v7x TensorCores.
        half = -(-B // 2)
        TB = min(tb_max, -(-half // row_align) * row_align)
    else:
        TB = tb_max

    grid = (pl.cdiv(B, TB),)   # ragged tail block is masked by Pallas; no pad / slice

    # Right-sized VMEM limit: double-buffered out tile + generous room for the f32
    # broadcast/arg/result values + the tiny resident inputs + slack.
    vmem_bytes = int(min(
        64 * 1024 * 1024,
        2 * TB * D * out_itemsize      # double-buffered output tile
        + 4 * TB * D * 4               # f32 intermediates / spill headroom
        + 2 * TB * 4                   # double-buffered t tile
        + 4 * D * 4                    # freq2 + phase2 (double-buffered)
        + (4 << 20)))                  # slack

    return pl.pallas_call(
        _sin_time_emb_kernel,
        out_shape=jax.ShapeDtypeStruct((B, D), out_dtype),
        grid=grid,
        in_specs=[
            pl.BlockSpec((TB, 1), lambda i: (i, 0)),
            pl.BlockSpec((1, D), lambda i: (0, 0)),   # resident across the B grid
            pl.BlockSpec((1, D), lambda i: (0, 0)),   # resident across the B grid
        ],
        out_specs=pl.BlockSpec((TB, D), lambda i: (i, 0)),
        compiler_params=pltpu.CompilerParams(
            dimension_semantics=("parallel",),         # shard B tiles across TCs (v7x)
            vmem_limit_bytes=vmem_bytes,
        ),
    )(t, freq2, phase2)


def make_inv_freq(embedding_dim):
    """Deterministic buffer identical to the PyTorch module's register_buffer."""
    half_dim = embedding_dim // 2
    ar = jnp.arange(0, half_dim, dtype=jnp.float32)
    # Note: divides by (half_dim - 1), matching the PyTorch module (undefined for
    # embedding_dim == 2, pre-existing behaviour).
    return jnp.exp(-math.log(10000.0) * ar / (half_dim - 1))


def _reference(t, inv_freq):
    t2 = t[:, None] if t.ndim == 1 else t
    arg = t2.astype(jnp.float32) * inv_freq.astype(jnp.float32)[None, :]
    return jnp.concatenate([jnp.sin(arg), jnp.cos(arg)], axis=-1)


if __name__ == "__main__":
    key = jax.random.PRNGKey(0)
    k1, k2, k3 = jax.random.split(key, 3)

    # Case 1: B=8, embedding_dim=128 (H=64 < 128 lanes) -> single grid step, f32.
    B1 = 8
    t1 = jax.random.uniform(k1, (B1,), dtype=jnp.float32) * 1000.0
    inv_freq_128 = make_inv_freq(128)
    emb1 = jax.block_until_ready(sinusoidal_time_embedding(t1, inv_freq_128))
    ref1 = _reference(t1, inv_freq_128)
    assert emb1.shape == (B1, 128), emb1.shape
    assert jnp.allclose(emb1, ref1, atol=2e-4, rtol=0.0), "mismatch (B=8, dim=128)"

    # Case 2: B=96, embedding_dim=256 (H=128) -> 2 grid steps (both v7x TCs), f32.
    B2 = 96
    t2 = jax.random.uniform(k2, (B2,), dtype=jnp.float32) * 1000.0
    inv_freq_256 = make_inv_freq(256)
    emb2 = jax.block_until_ready(sinusoidal_time_embedding(t2, inv_freq_256))
    ref2 = _reference(t2, inv_freq_256)
    assert emb2.shape == (B2, 256), emb2.shape
    assert jnp.allclose(emb2, ref2, atol=2e-4, rtol=0.0), "mismatch (B=96, dim=256)"

    # Case 3: B=40, embedding_dim=256, bf16 output -> ragged (masked) tail block +
    # narrow store path.
    B3 = 40
    t3 = jax.random.uniform(k3, (B3,), dtype=jnp.float32) * 1000.0
    emb3 = jax.block_until_ready(
        sinusoidal_time_embedding(t3, inv_freq_256, out_dtype=jnp.bfloat16))
    ref3 = _reference(t3, inv_freq_256)
    assert emb3.shape == (B3, 256), emb3.shape
    assert emb3.dtype == jnp.bfloat16
    assert jnp.allclose(emb3.astype(jnp.float32), ref3, atol=1e-2, rtol=0.0), \
        "mismatch (B=40, dim=256, bf16)"

    print("KERNEL_OK")
</pallas_src>

<mosaic_0001>
module attributes {stable_mosaic.version = 11 : i64} {
  func.func @_sin_time_emb_kernel(%arg0: i32, %arg1: memref<8x1xf32, #tpu.memory_space<vmem>>, %arg2: memref<1x128xf32, #tpu.memory_space<vmem>>, %arg3: memref<1x128xf32, #tpu.memory_space<vmem>>, %arg4: memref<8x128xf32, #tpu.memory_space<vmem>>) attributes {dimension_semantics = [#tpu.dimension_semantics<parallel>], iteration_bounds = array<i64: 1>, scalar_prefetch = 0 : i64, scratch_operands = 0 : i64, tpu.core_type = #tpu.core_type<tc>, window_params = [{transform_indices = @transform_0, window_bounds = array<i64: 8, 1>}, {pipeline_mode = #tpu.pipeline_mode<synchronous>, transform_indices = @transform_1, window_bounds = array<i64: 1, 128>}, {pipeline_mode = #tpu.pipeline_mode<synchronous>, transform_indices = @transform_2, window_bounds = array<i64: 1, 128>}, {transform_indices = @transform_3, window_bounds = array<i64: 8, 128>}]} {
    %c0 = arith.constant 0 : index
    %c0_0 = arith.constant 0 : index
    %0 = vector.load %arg1[%c0, %c0_0] : memref<8x1xf32, #tpu.memory_space<vmem>>, vector<8x1xf32>
    %c0_1 = arith.constant 0 : index
    %c0_2 = arith.constant 0 : index
    %1 = vector.load %arg2[%c0_1, %c0_2] : memref<1x128xf32, #tpu.memory_space<vmem>>, vector<1x128xf32>
    %2 = vector.broadcast %0 : vector<8x1xf32> to vector<8x128xf32>
    %3 = vector.broadcast %1 : vector<1x128xf32> to vector<8x128xf32>
    %4 = arith.mulf %2, %3 : vector<8x128xf32>
    %c0_3 = arith.constant 0 : index
    %c0_4 = arith.constant 0 : index
    %5 = vector.load %arg3[%c0_3, %c0_4] : memref<1x128xf32, #tpu.memory_space<vmem>>, vector<1x128xf32>
    %6 = vector.broadcast %5 : vector<1x128xf32> to vector<8x128xf32>
    %7 = arith.addf %4, %6 : vector<8x128xf32>
    %8 = math.sin %7 : vector<8x128xf32>
    %c0_5 = arith.constant 0 : index
    %c0_6 = arith.constant 0 : index
    %9 = vector.load %arg4[%c0_5, %c0_6] : memref<8x128xf32, #tpu.memory_space<vmem>>, vector<8x128xf32>
    tpu.vector_store %arg4[%c0_5, %c0_6], %8 {strides = array<i32>} : memref<8x128xf32, #tpu.memory_space<vmem>>, vector<8x128xf32>,
    return
  }
  func.func @transform_0(%arg0: i32) -> (i32, i32) {
    %c0_i32 = arith.constant 0 : i32
    %c0_i32_0 = arith.constant 0 : i32
    return %arg0, %c0_i32 : i32, i32
  }
  func.func @transform_1(%arg0: i32) -> (i32, i32) {
    %c0_i32 = arith.constant 0 : i32
    %c0_i32_0 = arith.constant 0 : i32
    %c0_i32_1 = arith.constant 0 : i32
    return %c0_i32, %c0_i32_0 : i32, i32
  }
  func.func @transform_2(%arg0: i32) -> (i32, i32) {
    %c0_i32 = arith.constant 0 : i32
    %c0_i32_0 = arith.constant 0 : i32
    %c0_i32_1 = arith.constant 0 : i32
    return %c0_i32, %c0_i32_0 : i32, i32
  }
  func.func @transform_3(%arg0: i32) -> (i32, i32) {
    %c0_i32 = arith.constant 0 : i32
    %c0_i32_0 = arith.constant 0 : i32
    return %arg0, %c0_i32 : i32, i32
  }
}

</mosaic_0001>

<llo_original>
// kernel: tpu_custom_call.1
$region0: #{tpu_custom_call.1}
  #allocation0 [shape = 'u32[]', space=smem, size = 0x4, offset = 0x4, fixed_abs, tag = 'smem constant byte address 0x4 - core index']
  #allocation1 [shape = 'u32[144,128]{1,0:T(1,128)}', space=vmem, size = 0x12000, scoped, tag = 'internal scratch']
  %s0 = inlined_call_operand.vmem [shape: f32[8,1], index: 0, kind: input, shape index: {}]
  %s1 = inlined_call_operand.vmem [shape: f32[1,128], index: 1, kind: input, shape index: {}]
  %s2 = inlined_call_operand.vmem [shape: f32[1,128], index: 2, kind: input, shape index: {}]
  %s3 = inlined_call_operand.hbm [shape: f32[8,128], index: 3, kind: output, shape index: {}]
  %s4 = sld [smem:[#allocation0]]
  $region22: #{tpu_custom_call.1} parent=0
    _
  %s6 = ssub.s32 1, %s4
  %s7 = scalar_select 0, %s6, %s4
  $region1: #{tpu_custom_call.1} parent=0
    #allocation2 [shape = 'u8[4096]{0}', space=vmem, size = 0x1000, scoped, tag = 'output window, operand 0, single buffered']
    #allocation3 [shape = 's32[1]{0}', space=sflag, size = 0x4, scoped, tag = 'scoped memory for tpu_custom_call.1']
    %8 = vsyncpa [#allocation3], 0
    // Predicated region
    $region2: #{tpu_custom_call.1} parent=1 // pred_check
      _
    $region3: #{tpu_custom_call.1} parent=1 // pred_check_branch
      %10 = sbr.rel (0) target = $region5
    $region4: #{tpu_custom_call.1} parent=1 // pred_region
      _
    $region5: #{tpu_custom_call.1} parent=1 // pred_fallthru
      _
    // Predicated region
    $region6: #{tpu_custom_call.1} parent=1 // pred_check
      _
    $region7: #{tpu_custom_call.1} parent=1 // pred_check_branch
      %12 = sbr.rel (0) target = $region9
    $region8: #{tpu_custom_call.1} parent=1 // pred_region
      _
    $region9: #{tpu_custom_call.1} parent=1 // pred_fallthru
      _
    // Predicated region
    $region10: #{tpu_custom_call.1} parent=1 // pred_check
      _
    $region11: #{tpu_custom_call.1} parent=1 // pred_check_branch
      %14 = sbr.rel (0) target = $region13
    $region12: #{tpu_custom_call.1} parent=1 // pred_region
      _
    $region13: #{tpu_custom_call.1} parent=1 // pred_fallthru
      _
    %v15 = vld [vmem:[%s0] sm:$0xff]
    %v16 = vld [vmem:[%s1] sm:$0x1]
    %18 = vset.pattern.permute.xlu0 0
    %19 = vperm.xlu0 %18, %v15
    %v20 = vpop.permute.xlu0 %19
    %v23 = vlaneseq
    %v24 = vshrl.u32 %v23, 7
    %v25 = vsub.s32 0, %v24
    %v26 = vrot.slane %v16, %v25
    %v28 = vmul.f32 %v20, %v26
    %v29 = vld [vmem:[%s2] sm:$0x1]
    %v31 = vlaneseq
    %v32 = vshrl.u32 %v31, 7
    %v33 = vsub.s32 0, %v32
    %v34 = vrot.slane %v29, %v33
    %v36 = vadd.f32 %v28, %v34
    %v37 = vand.u32 2147483647, %v36
    %vm38 = vcmp.le.f32.partialorder %v37, 0.7853982
    %vm39 = vcmp.lt.s32.totalorder %v36, 0
    %v40 = vand.u32 %v36, 2139095040
    %v41 = vshrl.u32 %v40, 23
    %v42 = vsub.s32 %v41, 127
    %v43 = vand.u32 2147483647, %v36
    %v44 = vand.u32 %v43, 8388607
    %v45 = vor.u32 %v44, 8388608
    %v46 = vsub.s32 0, %v45
    %v47 = vadd.s32 %v42, 1
    %vm48 = vcmp.gt.s32.totalorder %v47, 0
    %v49 = vsel %vm48, %v47, 0
    %v50 = vshrl.u32 %v49, 5
    %v51 = vand.u32 %v49, 31
    %v52 = vsub.s32 32, %v51
    %v53 = vshrl.u32 683565275, %v52
    %v54 = vshll.u32 683565275, %v51
    %v55 = vshrl.u32 2475754826, %v52
    %v56 = vor.u32 %v54, %v55
    %v57 = vshll.u32 2475754826, %v51
    %v58 = vshrl.u32 2131351028, %v52
    %v59 = vor.u32 %v57, %v58
    %v60 = vshll.u32 2131351028, %v51
    %v61 = vshrl.u32 2102212464, %v52
    %v62 = vor.u32 %v60, %v61
    %v63 = vshll.u32 2102212464, %v51
    %v64 = vshrl.u32 920167782, %v52
    %v65 = vor.u32 %v63, %v64
    %v66 = vshll.u32 920167782, %v51
    %v67 = vshrl.u32 1326507024, %v52
    %v68 = vor.u32 %v66, %v67
    %vm69 = vcmp.lt.s32.totalorder %v50, 1
    %vm70 = vcmp.lt.s32.totalorder %v50, 2
    %vm71 = vcmp.lt.s32.totalorder %v50, 3
    %vm72 = vcmp.lt.s32.totalorder %v50, 4
    %v73 = vsel %vm69, %v53, %v56
    %v74 = vsel %vm72, %v62, 2102212464
    %v75 = vsel %vm71, %v59, %v74
    %v76 = vsel %vm70, %v73, %v75
    %v77 = vsel %vm69, %v56, %v59
    %v78 = vsel %vm72, %v65, 920167782
    %v79 = vsel %vm71, %v62, %v78
    %v80 = vsel %vm70, %v77, %v79
    %v81 = vsel %vm69, %v59, %v62
    %v82 = vsel %vm72, %v68, 1326507024
    %v83 = vsel %vm71, %v65, %v82
    %v84 = vsel %vm70, %v81, %v83
    %v85 = vshll.u32 %v45, 8
    %v86 = vmul.u32.u64.compose %v85, %v84
    %v87 = vextract.low.u32 %v86
    %v88 = vextract.high.u32 %v86
    %v89 = vmul.u32.u64.compose %v85, %v80
    %v90 = vextract.low.u32 %v89
    %v91 = vextract.high.u32 %v89
    %v92 = vmul.u32 %v85, %v76
    %v93 = vadd.s32 %v88, %v90
    %vm94 = vc.u32 %v88, %v90
    %v95 = vadd.s32 %v91, 1
    %v96 = vsel %vm94, %v95, %v91
    %v97 = vadd.s32 %v92, %v96
    %v98 = vadd.s32 %v97, 536870912
    %v99 = vshrl.u32 %v98, 30
    %v100 = vshll.u32 %v99, 30
    %v101 = vsub.s32 %v97, %v100
    %vm102 = vcmp.lt.s32.totalorder %v101, 0
    %v103 = vsub.s32 0, %v101
    %v104 = vsel %vm102, %v103, %v101
    %v105 = vclz %v104
    %v106 = vsub.s32 %v105, 2
    %vm107 = vcmp.gt.s32.totalorder 0, %v106
    %v108 = vsel %vm107, 0, %v106
    %v109 = vsub.s32 32, %v108
    %v110 = vshll.u32 %v101, %v108
    %v111 = vshrl.u32 %v93, %v109
    %v112 = vor.u32 %v110, %v111
    %v113 = vsub.s32 4294967266, %v108
    %v114 = vadd.s32 %v113, 127
    %v115 = vshll.u32 %v114, 23
    %v116 = vor.u32 4788187, %v115
    %v117 = vand.u32 2147483647, %v116
    %v119 = vcvt.s32.f32 %v112
    %v120 = vmul.f32 %v119, %v117
    %v121 = vxor.u32 %v120, 2147483648
    %v122 = vsel %vm39, %v121, %v120
    %v123 = vsub.s32 4, %v99
    %v124 = vsel %vm39, %v123, %v99
    %v125 = vsel %vm38, %v36, %v122
    %v126 = vsel %vm38, 0, %v124
    %v127 = vcosq.f32.pop %v125
    %v128 = vsinq.f32.pop %v125
    %vm129 = vweird.f32 %v36
    %v130 = vadd.s32 %v126, 3
    %v131 = vand.u32 %v130, 3
    %vm132 = vcmp.lt.s32.totalorder %v131, 2
    %vm133 = vcmp.eq.s32.totalorder %v131, 0
    %v134 = vxor.u32 %v128, 2147483648
    %v135 = vsel %vm133, %v127, %v134
    %vm136 = vcmp.eq.s32.totalorder %v131, 2
    %v137 = vxor.u32 %v127, 2147483648
    %v138 = vsel %vm136, %v137, %v128
    %v139 = vsel %vm132, %v135, %v138
    %v140 = vsel %vm129, nan, %v139
    %141 = vst [vmem:[#allocation2] sm:$0xff] %v140
    // Predicated region
    $region14: #{tpu_custom_call.1} parent=1 // pred_check
      _
    $region15: #{tpu_custom_call.1} parent=1 // pred_check_branch
      %143 = sbr.rel (0) target = $region17
    $region16: #{tpu_custom_call.1} parent=1 // pred_region
      %s145 = ssub.s32 128, 128
      %146 = vsyncadd [#allocation3], %s145
      %s148 = sshll.u32 [#allocation2], 4
      %s149 = int_to_ptr.vmem [resolvable:$true] %s148
      %151 = dma.vmem_to_hbm [thread:$0]  %s149, 128, %s3, [#allocation3]
    $region17: #{tpu_custom_call.1} parent=1 // pred_fallthru
      _
    // Predicated region
    $region18: #{tpu_custom_call.1} parent=1 // pred_check
      _
    $region19: #{tpu_custom_call.1} parent=1 // pred_check_branch
      %153 = sbr.rel (0) target = $region21
    $region20: #{tpu_custom_call.1} parent=1 // pred_region
      %154 = dma.done [#allocation3], 128
    $region21: #{tpu_custom_call.1} parent=1 // pred_fallthru
      _
    %155 = vsyncpa [#allocation3], 1

</llo_original>
